<compile_context>
chip_gen: v7x
topology: tpu7x:2x2x1
jax: 0.10.0
libtpu: 0.0.40
codegen_flags: <defaults>
</compile_context>

<pallas_src>
import functools

import jax
import jax.numpy as jnp
import numpy as np
from jax import lax
from jax.experimental import pallas as pl


# rhs-transposed contraction: contract last dim of lhs with last dim of rhs (NT)
_NT = (((1,), (1,)), ((), ()))


# ------------------------------ Pallas kernel --------------------------------

def _fused_forward_kernel(a_ref, x_ref, w_ref, sel_ref, out_ref, *,
                          f_in, hid, f_out, r1n, r2, rb1, rb2):
    """Whole forward, feature-major (features on sublanes, nodes/edges on lanes).

    a_ref   : (N, N)        row-normalized mean adjacency A (A[dst,src] = 1/in_deg(dst))
    x_ref   : (N, F_in)     node features (node-major, model dtype f32)
    w_ref   : (R, C)        packed bf16 weight/bias slab (layout: see pack_params)
    sel_ref : (N, 4*E_pad)  bf16 one-hot selectors [u_pos | u_neg | v_pos | v_neg]
    out_ref : (1, 2*E_pad)  f32 scores: lanes [0,E_pad)=pos, [E_pad,2*E_pad)=neg
    """
    f32 = jnp.float32
    bf16 = jnp.bfloat16

    a = a_ref[...]                         # bf16 (N, N)
    xb = x_ref[...].astype(bf16)           # bf16 (N, F_in)

    # static, aligned slices of the packed parameter slab (all start at lane 0)
    w1s = w_ref[0:hid, 0:f_in]                         # W_self1.T   (H, F_in)
    w1n = w_ref[r1n:r1n + hid, 0:f_in]                 # W_neigh1.T  (H, F_in)
    w2 = w_ref[r2:r2 + 2 * f_out, 0:hid]               # [W_self2.T ; W_neigh2.T]
    b1 = w_ref[rb1:rb1 + hid, 0:1].astype(f32)         # (H, 1)
    b2 = w_ref[rb2:rb2 + f_out, 0:1].astype(f32)       # (F_out, 1)

    # ---- SAGEConv 1 ('mean') + ReLU, feature-major output (H, N) ----
    ax = jnp.dot(a, xb, preferred_element_type=f32)    # (N, F_in) = A @ X  (mean agg)
    h1 = (lax.dot_general(w1s, xb, _NT, preferred_element_type=f32)
          + lax.dot_general(w1n, ax.astype(bf16), _NT, preferred_element_type=f32)
          + b1)                                        # (H, N) = conv1(X).T
    h1 = jnp.maximum(h1, 0.0)

    # ---- SAGEConv 2 ('mean'); neighbor path as A @ (H @ W_neigh) since F_out < H ----
    hw = jnp.dot(w2, h1.astype(bf16), preferred_element_type=f32)      # (2*F_out, N)
    neigh = lax.dot_general(hw[f_out:].astype(bf16), a, _NT,
                            preferred_element_type=f32)                # (A H W_neigh2).T
    h2 = hw[:f_out] + neigh + b2                                       # (F_out, N)

    # ---- both DotProductPredictors with a single wide selector matmul ----
    g = jnp.dot(h2.astype(bf16), sel_ref[...], preferred_element_type=f32)  # (F_out, 4*E_pad)
    half = sel_ref.shape[1] // 2
    # lanes: [0,E_pad) -> u_pos.v_pos (pos scores), [E_pad,2*E_pad) -> u_neg.v_neg (neg)
    out_ref[...] = jnp.sum(g[:, :half] * g[:, half:], axis=0, keepdims=True)


def _full_block(shape):
    return pl.BlockSpec(shape, lambda: (0,) * len(shape))


def fused_forward(a, x, wslab, sel, *, f_in, hid, f_out, r1n, r2, rb1, rb2):
    out_lanes = sel.shape[1] // 2
    kernel = functools.partial(_fused_forward_kernel, f_in=f_in, hid=hid, f_out=f_out,
                               r1n=r1n, r2=r2, rb1=rb1, rb2=rb2)
    operands = (a, x, wslab, sel)
    return pl.pallas_call(
        kernel,
        out_shape=jax.ShapeDtypeStruct((1, out_lanes), jnp.float32),
        in_specs=[_full_block(op.shape) for op in operands],
        out_specs=_full_block((1, out_lanes)),
    )(*operands)


# --------------------- static graph / parameter preprocessing ----------------

def mean_adjacency(src, dst, num_nodes, dtype=jnp.bfloat16):
    """Row-normalized A with A[dst, src] += 1 per edge; rows divided by clamp(in_deg, 1)."""
    src = np.asarray(src)
    dst = np.asarray(dst)
    a = np.zeros((num_nodes, num_nodes), np.float32)
    np.add.at(a, (dst, src), 1.0)                      # duplicate edges keep multiplicity
    deg = np.clip(a.sum(axis=1, keepdims=True), 1.0, None)
    return jnp.asarray(a / deg, dtype)


def packed_edge_selectors(pos_src, pos_dst, neg_src, neg_dst, num_nodes, e_pad,
                          dtype=jnp.bfloat16):
    """One (N, 4*E_pad) slab of one-hot selectors: [u_pos | u_neg | v_pos | v_neg]."""
    def one_hot(idx):
        idx = np.asarray(idx)
        m = np.zeros((num_nodes, e_pad), np.float32)
        m[idx, np.arange(idx.shape[0])] = 1.0          # pad columns stay all-zero
        return m
    sel = np.concatenate([one_hot(pos_src), one_hot(neg_src),
                          one_hot(pos_dst), one_hot(neg_dst)], axis=1)
    return jnp.asarray(sel, dtype)


def _align16(n):
    return ((n + 15) // 16) * 16


def pack_params(params, dtype=jnp.bfloat16):
    """Pack all weights/biases into one bf16 slab (single input stream / DMA)."""
    w_self1 = np.asarray(params["w_self1"], np.float32)
    w_neigh1 = np.asarray(params["w_neigh1"], np.float32)
    b1 = np.asarray(params["b1"], np.float32).reshape(-1)
    w_self2 = np.asarray(params["w_self2"], np.float32)
    w_neigh2 = np.asarray(params["w_neigh2"], np.float32)
    b2 = np.asarray(params["b2"], np.float32).reshape(-1)

    f_in, hid = w_self1.shape
    f_out = w_self2.shape[1]

    r1n = _align16(hid)                   # W_neigh1.T rows
    r2 = _align16(r1n + hid)              # [W_self2.T ; W_neigh2.T] rows
    rb1 = _align16(r2 + 2 * f_out)        # b1 column (lane 0)
    rb2 = _align16(rb1 + hid)             # b2 column (lane 0)
    rows = _align16(rb2 + f_out)
    cols = max(f_in, hid)

    slab = np.zeros((rows, cols), np.float32)
    slab[0:hid, 0:f_in] = w_self1.T
    slab[r1n:r1n + hid, 0:f_in] = w_neigh1.T
    slab[r2:r2 + f_out, 0:hid] = w_self2.T
    slab[r2 + f_out:r2 + 2 * f_out, 0:hid] = w_neigh2.T
    slab[rb1:rb1 + hid, 0] = b1
    slab[rb2:rb2 + f_out, 0] = b2

    layout = dict(f_in=f_in, hid=hid, f_out=f_out, r1n=r1n, r2=r2, rb1=rb1, rb2=rb2)
    return jnp.asarray(slab, dtype), layout


def init_params(key, in_features, hidden_features, out_features):
    ks = jax.random.split(key, 6)
    s = 0.1
    return {
        "w_self1":  s * jax.random.normal(ks[0], (in_features, hidden_features), jnp.float32),
        "w_neigh1": s * jax.random.normal(ks[1], (in_features, hidden_features), jnp.float32),
        "b1":       s * jax.random.normal(ks[2], (1, hidden_features), jnp.float32),
        "w_self2":  s * jax.random.normal(ks[3], (hidden_features, out_features), jnp.float32),
        "w_neigh2": s * jax.random.normal(ks[4], (hidden_features, out_features), jnp.float32),
        "b2":       s * jax.random.normal(ks[5], (1, out_features), jnp.float32),
    }


# ------------------------------ reference (plain JAX, f32) -------------------

def reference_forward(params, g_src, g_dst, neg_src, neg_dst, x):
    n = x.shape[0]
    a = np.zeros((n, n), np.float32)
    np.add.at(a, (np.asarray(g_dst), np.asarray(g_src)), 1.0)
    deg = np.clip(a.sum(1, keepdims=True), 1.0, None)
    a = jnp.asarray(a / deg)
    h = x @ params["w_self1"] + (a @ x) @ params["w_neigh1"] + params["b1"]
    h = jnp.maximum(h, 0.0)
    h = h @ params["w_self2"] + (a @ h) @ params["w_neigh2"] + params["b2"]
    pos = jnp.sum(h[np.asarray(g_src)] * h[np.asarray(g_dst)], axis=-1, keepdims=True)
    neg = jnp.sum(h[np.asarray(neg_src)] * h[np.asarray(neg_dst)], axis=-1, keepdims=True)
    return pos, neg


# ------------------------------------ main ------------------------------------

if __name__ == "__main__":
    key = jax.random.PRNGKey(0)
    k_param, k_x, k_neg = jax.random.split(key, 3)

    num_nodes = 16
    in_features, hidden_features, out_features = 8, 32, 16

    # deterministic positive graph: ring edges + skip-2 edges  (E = 32)
    nodes = np.arange(num_nodes, dtype=np.int32)
    g_src = np.concatenate([nodes, nodes])
    g_dst = np.concatenate([(nodes + 1) % num_nodes, (nodes + 2) % num_nodes])

    # deterministic negative graph: same sources, permuted destinations (E = 32)
    neg_src = g_src
    neg_dst = np.asarray(jax.random.permutation(k_neg, jnp.asarray(g_dst)))

    E = int(g_src.shape[0])
    E_pad = max(128, ((E + 127) // 128) * 128)   # lane-dense score slab width per graph

    x = jax.random.normal(k_x, (num_nodes, in_features), jnp.float32)
    params = init_params(k_param, in_features, hidden_features, out_features)

    # static-graph / parameter preprocessing: ONCE, outside the jitted forward
    a = mean_adjacency(g_src, g_dst, num_nodes)
    sel = packed_edge_selectors(g_src, g_dst, neg_src, neg_dst, num_nodes, E_pad)
    wslab, layout = pack_params(params)

    forward = jax.jit(functools.partial(fused_forward, **layout))
    scores = forward(a, x, wslab, sel)               # (1, 2*E_pad)
    jax.block_until_ready(scores)

    # match the original module's (E, 1) edge-score outputs
    pos_score = scores[0, :E].reshape(E, 1)
    neg_score = scores[0, E_pad:E_pad + E].reshape(E, 1)
    assert pos_score.shape == (E, 1) and neg_score.shape == (E, 1)

    ref_pos, ref_neg = reference_forward(params, g_src, g_dst, neg_src, neg_dst, x)
    # Tolerance sized for bf16 MXU inputs (f32 accumulation): observed error is
    # ~1e-3..1e-2 absolute at these scales.  An all-f32 variant passes at 1e-5.
    assert np.allclose(np.asarray(pos_score), np.asarray(ref_pos), rtol=5e-2, atol=5e-2)
    assert np.allclose(np.asarray(neg_score), np.asarray(ref_neg), rtol=5e-2, atol=5e-2)

    print("KERNEL_OK")
</pallas_src>

<mosaic_0001>
module attributes {stable_mosaic.version = 11 : i64} {
  func.func @_fused_forward_kernel(%arg0: memref<16x16xbf16, #tpu.memory_space<vmem>>, %arg1: memref<16x8xf32, #tpu.memory_space<vmem>>, %arg2: memref<144x32xbf16, #tpu.memory_space<vmem>>, %arg3: memref<16x512xbf16, #tpu.memory_space<vmem>>, %arg4: memref<1x256xf32, #tpu.memory_space<vmem>>) attributes {dimension_semantics = [], scalar_prefetch = 0 : i64, scratch_operands = 0 : i64, tpu.core_type = #tpu.core_type<tc>} {
    %c0 = arith.constant 0 : index
    %c0_0 = arith.constant 0 : index
    %0 = vector.load %arg0[%c0, %c0_0] : memref<16x16xbf16, #tpu.memory_space<vmem>>, vector<16x16xbf16>
    %c0_1 = arith.constant 0 : index
    %c0_2 = arith.constant 0 : index
    %1 = vector.load %arg1[%c0_1, %c0_2] : memref<16x8xf32, #tpu.memory_space<vmem>>, vector<16x8xf32>
    %2 = arith.truncf %1 : vector<16x8xf32> to vector<16x8xbf16>
    %c0_3 = arith.constant 0 : index
    %c0_4 = arith.constant 0 : index
    %3 = vector.load %arg2[%c0_3, %c0_4] : memref<144x32xbf16, #tpu.memory_space<vmem>>, vector<32x8xbf16>
    %c32 = arith.constant 32 : index
    %c0_5 = arith.constant 0 : index
    %4 = vector.load %arg2[%c32, %c0_5] : memref<144x32xbf16, #tpu.memory_space<vmem>>, vector<32x8xbf16>
    %c64 = arith.constant 64 : index
    %c0_6 = arith.constant 0 : index
    %5 = vector.load %arg2[%c64, %c0_6] : memref<144x32xbf16, #tpu.memory_space<vmem>>, vector<32x32xbf16>
    %c96 = arith.constant 96 : index
    %c0_7 = arith.constant 0 : index
    %6 = vector.load %arg2[%c96, %c0_7] : memref<144x32xbf16, #tpu.memory_space<vmem>>, vector<32x1xbf16>
    %7 = arith.extf %6 : vector<32x1xbf16> to vector<32x1xf32>
    %c128 = arith.constant 128 : index
    %c0_8 = arith.constant 0 : index
    %8 = vector.load %arg2[%c128, %c0_8] : memref<144x32xbf16, #tpu.memory_space<vmem>>, vector<16x1xbf16>
    %9 = arith.extf %8 : vector<16x1xbf16> to vector<16x1xf32>
    %cst = arith.constant dense<0.000000e+00> : vector<16x8xf32>
    %10 = tpu.matmul %0, %2, %cst {dimension_numbers = #tpu.dot_dimension_numbers<[1], [0], [0], [1], [0, 0, 1, 1], [], []>} : vector<16x16xbf16>, vector<16x8xbf16>, vector<16x8xf32> -> vector<16x8xf32>
    %cst_9 = arith.constant dense<0.000000e+00> : vector<32x16xf32>
    %11 = tpu.matmul %3, %2, %cst_9 {dimension_numbers = #tpu.dot_dimension_numbers<[1], [1], [0], [0], [0, 0, 1, 0], [], []>} : vector<32x8xbf16>, vector<16x8xbf16>, vector<32x16xf32> -> vector<32x16xf32>
    %12 = arith.truncf %10 : vector<16x8xf32> to vector<16x8xbf16>
    %cst_10 = arith.constant dense<0.000000e+00> : vector<32x16xf32>
    %13 = tpu.matmul %4, %12, %cst_10 {dimension_numbers = #tpu.dot_dimension_numbers<[1], [1], [0], [0], [0, 0, 1, 0], [], []>} : vector<32x8xbf16>, vector<16x8xbf16>, vector<32x16xf32> -> vector<32x16xf32>
    %14 = arith.addf %11, %13 : vector<32x16xf32>
    %15 = vector.broadcast %7 : vector<32x1xf32> to vector<32x16xf32>
    %16 = arith.addf %14, %15 : vector<32x16xf32>
    %cst_11 = arith.constant 0.000000e+00 : f32
    %17 = vector.broadcast %cst_11 : f32 to vector<32x16xf32>
    %18 = arith.maximumf %16, %17 : vector<32x16xf32>
    %19 = arith.truncf %18 : vector<32x16xf32> to vector<32x16xbf16>
    %cst_12 = arith.constant dense<0.000000e+00> : vector<32x16xf32>
    %20 = tpu.matmul %5, %19, %cst_12 {dimension_numbers = #tpu.dot_dimension_numbers<[1], [0], [0], [1], [0, 0, 1, 1], [], []>} : vector<32x32xbf16>, vector<32x16xbf16>, vector<32x16xf32> -> vector<32x16xf32>
    %21 = vector.extract_strided_slice %20 {offsets = [16, 0], sizes = [16, 16], strides = [1, 1]} : vector<32x16xf32> to vector<16x16xf32>
    %22 = arith.truncf %21 : vector<16x16xf32> to vector<16x16xbf16>
    %cst_13 = arith.constant dense<0.000000e+00> : vector<16x16xf32>
    %23 = tpu.matmul %22, %0, %cst_13 {dimension_numbers = #tpu.dot_dimension_numbers<[1], [1], [0], [0], [0, 0, 1, 0], [], []>} : vector<16x16xbf16>, vector<16x16xbf16>, vector<16x16xf32> -> vector<16x16xf32>
    %24 = vector.extract_strided_slice %20 {offsets = [0, 0], sizes = [16, 16], strides = [1, 1]} : vector<32x16xf32> to vector<16x16xf32>
    %25 = arith.addf %24, %23 : vector<16x16xf32>
    %26 = vector.broadcast %9 : vector<16x1xf32> to vector<16x16xf32>
    %27 = arith.addf %25, %26 : vector<16x16xf32>
    %28 = arith.truncf %27 : vector<16x16xf32> to vector<16x16xbf16>
    %c0_14 = arith.constant 0 : index
    %c0_15 = arith.constant 0 : index
    %29 = vector.load %arg3[%c0_14, %c0_15] : memref<16x512xbf16, #tpu.memory_space<vmem>>, vector<16x512xbf16>
    %cst_16 = arith.constant dense<0.000000e+00> : vector<16x512xf32>
    %30 = tpu.matmul %28, %29, %cst_16 {dimension_numbers = #tpu.dot_dimension_numbers<[1], [0], [0], [1], [0, 0, 1, 1], [], []>} : vector<16x16xbf16>, vector<16x512xbf16>, vector<16x512xf32> -> vector<16x512xf32>
    %31 = vector.extract_strided_slice %30 {offsets = [0, 0], sizes = [16, 256], strides = [1, 1]} : vector<16x512xf32> to vector<16x256xf32>
    %32 = vector.extract_strided_slice %30 {offsets = [0, 256], sizes = [16, 256], strides = [1, 1]} : vector<16x512xf32> to vector<16x256xf32>
    %33 = arith.mulf %31, %32 : vector<16x256xf32>
    %cst_17 = arith.constant dense<0.000000e+00> : vector<256xf32>
    %34 = vector.multi_reduction <add>, %33, %cst_17 [0] : vector<16x256xf32> to vector<256xf32>
    %35 = vector.shape_cast %34 : vector<256xf32> to vector<1x256xf32>
    %c0_18 = arith.constant 0 : index
    %c0_19 = arith.constant 0 : index
    %36 = vector.load %arg4[%c0_18, %c0_19] : memref<1x256xf32, #tpu.memory_space<vmem>>, vector<1x256xf32>
    tpu.vector_store %arg4[%c0_18, %c0_19], %35 {strides = array<i32>} : memref<1x256xf32, #tpu.memory_space<vmem>>, vector<1x256xf32>,
    return
  }
}

</mosaic_0001>

<llo_original>
// kernel: fused_forward.1
$region0: #{fused_forward.1}
  #allocation0 [shape = 'u32[]', space=smem, size = 0x4, offset = 0x4, fixed_abs, tag = 'smem constant byte address 0x4 - core index']
  #allocation1 [shape = 'u32[144,128]{1,0:T(1,128)}', space=vmem, size = 0x12000, scoped, tag = 'internal scratch']
  %s0 = inlined_call_operand.vmem [shape: bf16[16,16], index: 0, kind: input, shape index: {}]
  %s1 = inlined_call_operand.vmem [shape: f32[16,8], index: 1, kind: input, shape index: {}]
  %s2 = inlined_call_operand.vmem [shape: bf16[144,32], index: 2, kind: input, shape index: {}]
  %s3 = inlined_call_operand.vmem [shape: bf16[16,512], index: 3, kind: input, shape index: {}]
  %s4 = inlined_call_operand.hbm [shape: f32[1,256], index: 4, kind: output, shape index: {}]
  %s5 = sld [smem:[#allocation0]]
  $region26: #{fused_forward.1} parent=0
    _
  %s7 = ssub.s32 1, %s5
  %s8 = scalar_select 0, %s7, %s5
  $region1: #{fused_forward.1} parent=0
    #allocation2 [shape = 'u8[1024]{0}', space=vmem, size = 0x400, scoped, tag = 'output window, operand 0, single buffered']
    #allocation3 [shape = 's32[1]{0}', space=sflag, size = 0x4, scoped, tag = 'scoped memory for fused_forward.1']
    %9 = vsyncpa [#allocation3], 0
    // Predicated region
    $region2: #{fused_forward.1} parent=1 // pred_check
      _
    $region3: #{fused_forward.1} parent=1 // pred_check_branch
      %11 = sbr.rel (0) target = $region5
    $region4: #{fused_forward.1} parent=1 // pred_region
      _
    $region5: #{fused_forward.1} parent=1 // pred_fallthru
      _
    // Predicated region
    $region6: #{fused_forward.1} parent=1 // pred_check
      _
    $region7: #{fused_forward.1} parent=1 // pred_check_branch
      %13 = sbr.rel (0) target = $region9
    $region8: #{fused_forward.1} parent=1 // pred_region
      _
    $region9: #{fused_forward.1} parent=1 // pred_fallthru
      _
    // Predicated region
    $region10: #{fused_forward.1} parent=1 // pred_check
      _
    $region11: #{fused_forward.1} parent=1 // pred_check_branch
      %15 = sbr.rel (0) target = $region13
    $region12: #{fused_forward.1} parent=1 // pred_region
      _
    $region13: #{fused_forward.1} parent=1 // pred_fallthru
      _
    // Predicated region
    $region14: #{fused_forward.1} parent=1 // pred_check
      _
    $region15: #{fused_forward.1} parent=1 // pred_check_branch
      %17 = sbr.rel (0) target = $region17
    $region16: #{fused_forward.1} parent=1 // pred_region
      _
    $region17: #{fused_forward.1} parent=1 // pred_fallthru
      _
    %v19 = vld [vmem:[%s0] sm:$0xf]
    %v20 = vld [vmem:[%s0 + $0x4] sm:$0xf]
    %v21 = vld [vmem:[%s1] sm:$0xff]
    %v22 = vld [vmem:[%s1 + $0x8] sm:$0xff]
    %v23 = vpack.c.bf16 %v22, %v21
    %v24 = vld [vmem:[%s2] sm:$0xf]
    %v25 = vld [vmem:[%s2 + $0x4] sm:$0xf]
    %v26 = vld [vmem:[%s2 + $0x8] sm:$0xf]
    %v27 = vld [vmem:[%s2 + $0xc] sm:$0xf]
    %v28 = vld [vmem:[%s2 + $0x10] sm:$0xf]
    %v29 = vld [vmem:[%s2 + $0x14] sm:$0xf]
    %v30 = vld [vmem:[%s2 + $0x18] sm:$0xf]
    %v31 = vld [vmem:[%s2 + $0x1c] sm:$0xf]
    %v32 = vld [vmem:[%s2 + $0x20] sm:$0xf]
    %v33 = vld [vmem:[%s2 + $0x24] sm:$0xf]
    %v34 = vld [vmem:[%s2 + $0x28] sm:$0xf]
    %v35 = vld [vmem:[%s2 + $0x2c] sm:$0xf]
    %v36 = vld [vmem:[%s2 + $0x30] sm:$0xf]
    %v37 = vld [vmem:[%s2 + $0x34] sm:$0xf]
    %v38 = vld [vmem:[%s2 + $0x38] sm:$0xf]
    %v39 = vld [vmem:[%s2 + $0x3c] sm:$0xf]
    %v40 = vunpack.c.l.bf16 %v36
    %v41 = vunpack.c.l.bf16 %v37
    %v42 = vunpack.c.l.bf16 %v38
    %v43 = vunpack.c.l.bf16 %v39
    %v44 = vld [vmem:[%s2 + $0x40] sm:$0xf]
    %v45 = vld [vmem:[%s2 + $0x44] sm:$0xf]
    %v46 = vunpack.c.l.bf16 %v44
    %v47 = vunpack.c.l.bf16 %v45
    %v50 = vunpack.c.l.b16 %v19
    %v51 = vunpack.c.l.b16 %v20
    %v52 = vpack.c.b16 %v51, %v50
    %vm53 = vcmask 130048
    %v55 = vsel %vm53, %v52, 0
    %57 = vmatprep.subr.bf16.mxu0 0
    %58 = vmatpush1.bf16.msra.mxu0 %v23
    %59 = vmatprep.subr.bf16.mxu0 0
    %60 = vmatpush1.bf16.msra.mxu0 0
    %61 = vmatprep.subr.bf16.mxu0 0
    %62 = vmatpush1.bf16.msra.mxu0 0
    %63 = vmatprep.subr.bf16.mxu0 0
    %64 = vmatpush1.bf16.msra.mxu0 0
    %65 = vmatprep.subr.bf16.mxu0 0
    %66 = vmatpush1.bf16.msra.mxu0 0
    %67 = vmatprep.subr.bf16.mxu0 0
    %68 = vmatpush1.bf16.msra.mxu0 0
    %69 = vmatprep.subr.bf16.mxu0 0
    %70 = vmatpush1.bf16.msra.mxu0 0
    %71 = vmatprep.subr.bf16.mxu0 0
    %72 = vmatpush1.bf16.msra.mxu0 0
    %73 = vmatprep.subr.bf16.mxu0 0
    %74 = vmatpush1.bf16.msra.mxu0 0
    %75 = vmatprep.subr.bf16.mxu0 0
    %76 = vmatpush1.bf16.msra.mxu0 0
    %77 = vmatprep.subr.bf16.mxu0 0
    %78 = vmatpush1.bf16.msra.mxu0 0
    %79 = vmatprep.subr.bf16.mxu0 0
    %80 = vmatpush1.bf16.msra.mxu0 0
    %81 = vmatprep.subr.bf16.mxu0 0
    %82 = vmatpush1.bf16.msra.mxu0 0
    %83 = vmatprep.subr.bf16.mxu0 0
    %84 = vmatpush1.bf16.msra.mxu0 0
    %85 = vmatprep.subr.bf16.mxu0 0
    %86 = vmatpush1.bf16.msra.mxu0 0
    %87 = vmatprep.subr.bf16.mxu0 0
    %88 = vmatpush1.bf16.msra.mxu0 0
    %89 = vmatprep.mubr.bf16.mxu0 0
    %90 = vmatmul.mubr.bf16.gmra.mrb[0].mxu0 %v55
    %v91 = vpop.f32.mrb[0].mxu0
    %v92 = vadd.f32 0.0, %v91
    %v93 = vpop.f32.mrb[0].mxu0
    %v94 = vpop.f32.mrb[0].mxu0
    %v95 = vadd.f32 0.0, %v94
    %v96 = vpop.f32.mrb[0].mxu0
    %97 = vdwg.mxu0
    %v98 = vpack.c.bf16 %v95, %v92
    %v103 = vunpack.c.l.b16 %v28
    %v104 = vunpack.c.l.b16 %v29
    %v105 = vunpack.c.l.b16 %v30
    %v106 = vunpack.c.l.b16 %v31
    %v107 = vpack.c.b16 %v104, %v103
    %v108 = vpack.c.b16 %v106, %v105
    %vm109 = vcmask 64512
    %v111 = vsel %vm109, %v107, 0
    %v114 = vsel %vm109, %v108, 0
    %v117 = vsel %vm109, %v98, 0
    %119 = vmatprep.subr.bf16.mxu0 0
    %120 = vmatpush1.bf16.xpose.msra.mxu0 %v117
    %121 = vmatprep.subr.bf16.mxu0 0
    %122 = vmatpush1.bf16.xpose.msra.mxu0 0
    %123 = vmatprep.subr.bf16.mxu0 0
    %124 = vmatpush1.bf16.xpose.msra.mxu0 0
    %125 = vmatprep.subr.bf16.mxu0 0
    %126 = vmatpush1.bf16.xpose.msra.mxu0 0
    %127 = vmatprep.subr.bf16.mxu0 0
    %128 = vmatpush1.bf16.xpose.msra.mxu0 0
    %129 = vmatprep.subr.bf16.mxu0 0
    %130 = vmatpush1.bf16.xpose.msra.mxu0 0
    %131 = vmatprep.subr.bf16.mxu0 0
    %132 = vmatpush1.bf16.xpose.msra.mxu0 0
    %133 = vmatprep.subr.bf16.mxu0 0
    %134 = vmatpush1.bf16.xpose.msra.mxu0 0
    %135 = vmatprep.subr.bf16.mxu0 0
    %136 = vmatpush1.bf16.xpose.msra.mxu0 0
    %137 = vmatprep.subr.bf16.mxu0 0
    %138 = vmatpush1.bf16.xpose.msra.mxu0 0
    %139 = vmatprep.subr.bf16.mxu0 0
    %140 = vmatpush1.bf16.xpose.msra.mxu0 0
    %141 = vmatprep.subr.bf16.mxu0 0
    %142 = vmatpush1.bf16.xpose.msra.mxu0 0
    %143 = vmatprep.subr.bf16.mxu0 0
    %144 = vmatpush1.bf16.xpose.msra.mxu0 0
    %145 = vmatprep.subr.bf16.mxu0 0
    %146 = vmatpush1.bf16.xpose.msra.mxu0 0
    %147 = vmatprep.subr.bf16.mxu0 0
    %148 = vmatpush1.bf16.xpose.msra.mxu0 0
    %149 = vmatprep.subr.bf16.mxu0 0
    %150 = vmatpush1.bf16.xpose.msra.mxu0 0
    %151 = vmatprep.mubr.bf16.mxu0 0
    %152 = vmatmul.mubr.bf16.gmra.mrb[0].mxu0 %v111
    %v153 = vpop.f32.mrb[0].mxu0
    %v154 = vadd.f32 0.0, %v153
    %v155 = vpop.f32.mrb[0].mxu0
    %v156 = vpop.f32.mrb[0].mxu0
    %v157 = vadd.f32 0.0, %v156
    %v158 = vpop.f32.mrb[0].mxu0
    %159 = vmatprep.mubr.bf16.mxu0 0
    %160 = vmatmul.mubr.bf16.gmra.mrb[0].mxu0 %v114
    %v161 = vpop.f32.mrb[0].mxu0
    %v162 = vadd.f32 0.0, %v161
    %v163 = vpop.f32.mrb[0].mxu0
    %v164 = vpop.f32.mrb[0].mxu0
    %v165 = vadd.f32 0.0, %v164
    %v166 = vpop.f32.mrb[0].mxu0
    %167 = vdwg.mxu0
    %v172 = vunpack.c.l.b16 %v24
    %v173 = vunpack.c.l.b16 %v25
    %v174 = vunpack.c.l.b16 %v26
    %v175 = vunpack.c.l.b16 %v27
    %v176 = vpack.c.b16 %v173, %v172
    %v177 = vpack.c.b16 %v175, %v174
    %v179 = vsel %vm109, %v176, 0
    %v182 = vsel %vm109, %v177, 0
    %v185 = vsel %vm109, %v23, 0
    %187 = vmatprep.subr.bf16.mxu0 0
    %188 = vmatpush1.bf16.xpose.msra.mxu0 %v185
    %189 = vmatprep.subr.bf16.mxu0 0
    %190 = vmatpush1.bf16.xpose.msra.mxu0 0
    %191 = vmatprep.subr.bf16.mxu0 0
    %192 = vmatpush1.bf16.xpose.msra.mxu0 0
    %193 = vmatprep.subr.bf16.mxu0 0
    %194 = vmatpush1.bf16.xpose.msra.mxu0 0
    %195 = vmatprep.subr.bf16.mxu0 0
    %196 = vmatpush1.bf16.xpose.msra.mxu0 0
    %197 = vmatprep.subr.bf16.mxu0 0
    %198 = vmatpush1.bf16.xpose.msra.mxu0 0
    %199 = vmatprep.subr.bf16.mxu0 0
    %200 = vmatpush1.bf16.xpose.msra.mxu0 0
    %201 = vmatprep.subr.bf16.mxu0 0
    %202 = vmatpush1.bf16.xpose.msra.mxu0 0
    %203 = vmatprep.subr.bf16.mxu0 0
    %204 = vmatpush1.bf16.xpose.msra.mxu0 0
    %205 = vmatprep.subr.bf16.mxu0 0
    %206 = vmatpush1.bf16.xpose.msra.mxu0 0
    %207 = vmatprep.subr.bf16.mxu0 0
    %208 = vmatpush1.bf16.xpose.msra.mxu0 0
    %209 = vmatprep.subr.bf16.mxu0 0
    %210 = vmatpush1.bf16.xpose.msra.mxu0 0
    %211 = vmatprep.subr.bf16.mxu0 0
    %212 = vmatpush1.bf16.xpose.msra.mxu0 0
    %213 = vmatprep.subr.bf16.mxu0 0
    %214 = vmatpush1.bf16.xpose.msra.mxu0 0
    %215 = vmatprep.subr.bf16.mxu0 0
    %216 = vmatpush1.bf16.xpose.msra.mxu0 0
    %217 = vmatprep.subr.bf16.mxu0 0
    %218 = vmatpush1.bf16.xpose.msra.mxu0 0
    %219 = vmatprep.mubr.bf16.mxu0 0
    %220 = vmatmul.mubr.bf16.gmra.mrb[0].mxu0 %v179
    %v221 = vpop.f32.mrb[0].mxu0
    %v222 = vadd.f32 %v154, %v221
    %v223 = vpop.f32.mrb[0].mxu0
    %v224 = vpop.f32.mrb[0].mxu0
    %v225 = vadd.f32 %v157, %v224
    %v226 = vpop.f32.mrb[0].mxu0
    %227 = vmatprep.mubr.bf16.mxu0 0
    %228 = vmatmul.mubr.bf16.gmra.mrb[0].mxu0 %v182
    %v229 = vpop.f32.mrb[0].mxu0
    %v230 = vadd.f32 %v162, %v229
    %v231 = vpop.f32.mrb[0].mxu0
    %v232 = vpop.f32.mrb[0].mxu0
    %v233 = vadd.f32 %v165, %v232
    %v234 = vpop.f32.mrb[0].mxu0
    %235 = vdwg.mxu0
    %237 = vset.pattern.permute.xlu0 0
    %238 = vperm.xlu0 %237, %v40
    %v239 = vpop.permute.xlu0 %238
    %242 = vset.pattern.permute.xlu0 0
    %243 = vperm.xlu0 %242, %v41
    %v244 = vpop.permute.xlu0 %243
    %247 = vset.pattern.permute.xlu0 0
    %248 = vperm.xlu0 %247, %v42
    %v249 = vpop.permute.xlu0 %248
    %252 = vset.pattern.permute.xlu0 0
    %253 = vperm.xlu0 %252, %v43
    %v254 = vpop.permute.xlu0 %253
    %v256 = vadd.f32 %v222, %v239
    %v257 = vadd.f32 %v225, %v244
    %v258 = vadd.f32 %v230, %v249
    %v259 = vadd.f32 %v233, %v254
    %v260 = vmax.f32 %v256, 0.0
    %v261 = vmax.f32 %v257, 0.0
    %v262 = vmax.f32 %v258, 0.0
    %v263 = vmax.f32 %v259, 0.0
    %v264 = vpack.c.bf16 %v261, %v260
    %v265 = vpack.c.bf16 %v263, %v262
    %v270 = vunpack.c.l.b16 %v32
    %v271 = vunpack.c.l.b16 %v33
    %v272 = vunpack.c.l.b16 %v34
    %v273 = vunpack.c.l.b16 %v35
    %v274 = vpack.c.b16 %v271, %v270
    %v275 = vpack.c.b16 %v273, %v272
    %vm276 = vcmask 261120
    %v278 = vsel %vm276, %v274, 0
    %v281 = vsel %vm276, %v275, 0
    %283 = vmatprep.subr.bf16.mxu0 0
    %284 = vmatpush1.bf16.msra.mxu0 %v264
    %285 = vmatprep.subr.bf16.mxu0 0
    %286 = vmatpush1.bf16.msra.mxu0 %v265
    %287 = vmatprep.subr.bf16.mxu0 0
    %288 = vmatpush1.bf16.msra.mxu0 0
    %289 = vmatprep.subr.bf16.mxu0 0
    %290 = vmatpush1.bf16.msra.mxu0 0
    %291 = vmatprep.subr.bf16.mxu0 0
    %292 = vmatpush1.bf16.msra.mxu0 0
    %293 = vmatprep.subr.bf16.mxu0 0
    %294 = vmatpush1.bf16.msra.mxu0 0
    %295 = vmatprep.subr.bf16.mxu0 0
    %296 = vmatpush1.bf16.msra.mxu0 0
    %297 = vmatprep.subr.bf16.mxu0 0
    %298 = vmatpush1.bf16.msra.mxu0 0
    %299 = vmatprep.subr.bf16.mxu0 0
    %300 = vmatpush1.bf16.msra.mxu0 0
    %301 = vmatprep.subr.bf16.mxu0 0
    %302 = vmatpush1.bf16.msra.mxu0 0
    %303 = vmatprep.subr.bf16.mxu0 0
    %304 = vmatpush1.bf16.msra.mxu0 0
    %305 = vmatprep.subr.bf16.mxu0 0
    %306 = vmatpush1.bf16.msra.mxu0 0
    %307 = vmatprep.subr.bf16.mxu0 0
    %308 = vmatpush1.bf16.msra.mxu0 0
    %309 = vmatprep.subr.bf16.mxu0 0
    %310 = vmatpush1.bf16.msra.mxu0 0
    %311 = vmatprep.subr.bf16.mxu0 0
    %312 = vmatpush1.bf16.msra.mxu0 0
    %313 = vmatprep.subr.bf16.mxu0 0
    %314 = vmatpush1.bf16.msra.mxu0 0
    %315 = vmatprep.mubr.bf16.mxu0 0
    %316 = vmatmul.mubr.bf16.gmra.mrb[0].mxu0 %v278
    %v317 = vpop.f32.mrb[0].mxu0
    %v318 = vadd.f32 0.0, %v317
    %v319 = vpop.f32.mrb[0].mxu0
    %v320 = vpop.f32.mrb[0].mxu0
    %v321 = vadd.f32 0.0, %v320
    %v322 = vpop.f32.mrb[0].mxu0
    %323 = vmatprep.mubr.bf16.mxu0 0
    %324 = vmatmul.mubr.bf16.gmra.mrb[0].mxu0 %v281
    %v325 = vpop.f32.mrb[0].mxu0
    %v326 = vadd.f32 0.0, %v325
    %v327 = vpop.f32.mrb[0].mxu0
    %v328 = vpop.f32.mrb[0].mxu0
    %v329 = vadd.f32 0.0, %v328
    %v330 = vpop.f32.mrb[0].mxu0
    %331 = vdwg.mxu0
    %v332 = vpack.c.bf16 %v329, %v326
    %v334 = vsel %vm53, %v332, 0
    %336 = vmatprep.subr.bf16.mxu0 0
    %337 = vmatpush1.bf16.xpose.msra.mxu0 %v55
    %338 = vmatprep.subr.bf16.mxu0 0
    %339 = vmatpush1.bf16.xpose.msra.mxu0 0
    %340 = vmatprep.subr.bf16.mxu0 0
    %341 = vmatpush1.bf16.xpose.msra.mxu0 0
    %342 = vmatprep.subr.bf16.mxu0 0
    %343 = vmatpush1.bf16.xpose.msra.mxu0 0
    %344 = vmatprep.subr.bf16.mxu0 0
    %345 = vmatpush1.bf16.xpose.msra.mxu0 0
    %346 = vmatprep.subr.bf16.mxu0 0
    %347 = vmatpush1.bf16.xpose.msra.mxu0 0
    %348 = vmatprep.subr.bf16.mxu0 0
    %349 = vmatpush1.bf16.xpose.msra.mxu0 0
    %350 = vmatprep.subr.bf16.mxu0 0
    %351 = vmatpush1.bf16.xpose.msra.mxu0 0
    %352 = vmatprep.subr.bf16.mxu0 0
    %353 = vmatpush1.bf16.xpose.msra.mxu0 0
    %354 = vmatprep.subr.bf16.mxu0 0
    %355 = vmatpush1.bf16.xpose.msra.mxu0 0
    %356 = vmatprep.subr.bf16.mxu0 0
    %357 = vmatpush1.bf16.xpose.msra.mxu0 0
    %358 = vmatprep.subr.bf16.mxu0 0
    %359 = vmatpush1.bf16.xpose.msra.mxu0 0
    %360 = vmatprep.subr.bf16.mxu0 0
    %361 = vmatpush1.bf16.xpose.msra.mxu0 0
    %362 = vmatprep.subr.bf16.mxu0 0
    %363 = vmatpush1.bf16.xpose.msra.mxu0 0
    %364 = vmatprep.subr.bf16.mxu0 0
    %365 = vmatpush1.bf16.xpose.msra.mxu0 0
    %366 = vmatprep.subr.bf16.mxu0 0
    %367 = vmatpush1.bf16.xpose.msra.mxu0 0
    %368 = vmatprep.mubr.bf16.mxu0 0
    %369 = vmatmul.mubr.bf16.gmra.mrb[0].mxu0 %v334
    %v370 = vpop.f32.mrb[0].mxu0
    %v371 = vadd.f32 0.0, %v370
    %v372 = vpop.f32.mrb[0].mxu0
    %v373 = vpop.f32.mrb[0].mxu0
    %v374 = vadd.f32 0.0, %v373
    %v375 = vpop.f32.mrb[0].mxu0
    %376 = vdwg.mxu0
    %v377 = vadd.f32 %v318, %v371
    %v378 = vadd.f32 %v321, %v374
    %380 = vset.pattern.permute.xlu0 0
    %381 = vperm.xlu0 %380, %v46
    %v382 = vpop.permute.xlu0 %381
    %385 = vset.pattern.permute.xlu0 0
    %386 = vperm.xlu0 %385, %v47
    %v387 = vpop.permute.xlu0 %386
    %v389 = vadd.f32 %v377, %v382
    %v390 = vadd.f32 %v378, %v387
    %v391 = vpack.c.bf16 %v390, %v389
    %v392 = vld [vmem:[%s3] sm:$0xff]
    %v393 = vld [vmem:[%s3 + $0x8] sm:$0xff]
    %v394 = vld [vmem:[%s3 + $0x10] sm:$0xff]
    %v395 = vld [vmem:[%s3 + $0x18] sm:$0xff]
    %v400 = vunpack.c.l.b16 %v392
    %v401 = vunpack.c.h.b16 %v392
    %v402 = vunpack.c.l.b16 %v393
    %v403 = vunpack.c.h.b16 %v393
    %v404 = vunpack.c.l.b16 %v394
    %v405 = vunpack.c.h.b16 %v394
    %v406 = vunpack.c.l.b16 %v395
    %v407 = vunpack.c.h.b16 %v395
    %v408 = vpack.c.b16 %v404, %v400
    %v409 = vpack.c.b16 %v405, %v401
    %v410 = vpack.c.b16 %v406, %v402
    %v411 = vpack.c.b16 %v407, %v403
    %v417 = vsel %vm53, %v391, 0
    %419 = vmatprep.subr.bf16.mxu0 %v409
    %420 = vmatpush1.bf16.msra.mxu0 %v408
    %421 = vmatprep.subr.bf16.mxu0 0
    %422 = vmatpush1.bf16.msra.mxu0 0
    %423 = vmatprep.subr.bf16.mxu0 0
    %424 = vmatpush1.bf16.msra.mxu0 0
    %425 = vmatprep.subr.bf16.mxu0 0
    %426 = vmatpush1.bf16.msra.mxu0 0
    %427 = vmatprep.subr.bf16.mxu0 0
    %428 = vmatpush1.bf16.msra.mxu0 0
    %429 = vmatprep.subr.bf16.mxu0 0
    %430 = vmatpush1.bf16.msra.mxu0 0
    %431 = vmatprep.subr.bf16.mxu0 0
    %432 = vmatpush1.bf16.msra.mxu0 0
    %433 = vmatprep.subr.bf16.mxu0 0
    %434 = vmatpush1.bf16.msra.mxu0 0
    %435 = vmatprep.subr.bf16.mxu0 0
    %436 = vmatpush1.bf16.msra.mxu0 0
    %437 = vmatprep.subr.bf16.mxu0 0
    %438 = vmatpush1.bf16.msra.mxu0 0
    %439 = vmatprep.subr.bf16.mxu0 0
    %440 = vmatpush1.bf16.msra.mxu0 0
    %441 = vmatprep.subr.bf16.mxu0 0
    %442 = vmatpush1.bf16.msra.mxu0 0
    %443 = vmatprep.subr.bf16.mxu0 0
    %444 = vmatpush1.bf16.msra.mxu0 0
    %445 = vmatprep.subr.bf16.mxu0 0
    %446 = vmatpush1.bf16.msra.mxu0 0
    %447 = vmatprep.subr.bf16.mxu0 0
    %448 = vmatpush1.bf16.msra.mxu0 0
    %449 = vmatprep.subr.bf16.mxu0 0
    %450 = vmatpush1.bf16.msra.mxu0 0
    %451 = vmatprep.mubr.bf16.mxu0 0
    %452 = vmatmul.mubr.bf16.gmra.mrb[0].mxu0 %v417
    %v453 = vpop.f32.mrb[0].mxu0
    %v454 = vadd.f32 0.0, %v453
    %v455 = vpop.f32.mrb[0].mxu0
    %v456 = vadd.f32 0.0, %v455
    %v457 = vpop.f32.mrb[0].mxu0
    %v458 = vadd.f32 0.0, %v457
    %v459 = vpop.f32.mrb[0].mxu0
    %v460 = vadd.f32 0.0, %v459
    %461 = vdwg.mxu0
    %462 = vmatprep.subr.bf16.mxu0 %v411
    %463 = vmatpush1.bf16.msra.mxu0 %v410
    %464 = vmatprep.subr.bf16.mxu0 0
    %465 = vmatpush1.bf16.msra.mxu0 0
    %466 = vmatprep.subr.bf16.mxu0 0
    %467 = vmatpush1.bf16.msra.mxu0 0
    %468 = vmatprep.subr.bf16.mxu0 0
    %469 = vmatpush1.bf16.msra.mxu0 0
    %470 = vmatprep.subr.bf16.mxu0 0
    %471 = vmatpush1.bf16.msra.mxu0 0
    %472 = vmatprep.subr.bf16.mxu0 0
    %473 = vmatpush1.bf16.msra.mxu0 0
    %474 = vmatprep.subr.bf16.mxu0 0
    %475 = vmatpush1.bf16.msra.mxu0 0
    %476 = vmatprep.subr.bf16.mxu0 0
    %477 = vmatpush1.bf16.msra.mxu0 0
    %478 = vmatprep.subr.bf16.mxu0 0
    %479 = vmatpush1.bf16.msra.mxu0 0
    %480 = vmatprep.subr.bf16.mxu0 0
    %481 = vmatpush1.bf16.msra.mxu0 0
    %482 = vmatprep.subr.bf16.mxu0 0
    %483 = vmatpush1.bf16.msra.mxu0 0
    %484 = vmatprep.subr.bf16.mxu0 0
    %485 = vmatpush1.bf16.msra.mxu0 0
    %486 = vmatprep.subr.bf16.mxu0 0
    %487 = vmatpush1.bf16.msra.mxu0 0
    %488 = vmatprep.subr.bf16.mxu0 0
    %489 = vmatpush1.bf16.msra.mxu0 0
    %490 = vmatprep.subr.bf16.mxu0 0
    %491 = vmatpush1.bf16.msra.mxu0 0
    %492 = vmatprep.subr.bf16.mxu0 0
    %493 = vmatpush1.bf16.msra.mxu0 0
    %494 = vmatprep.mubr.bf16.mxu0 0
    %495 = vmatmul.mubr.bf16.gmra.mrb[0].mxu0 %v417
    %v496 = vpop.f32.mrb[0].mxu0
    %v497 = vadd.f32 0.0, %v496
    %v498 = vpop.f32.mrb[0].mxu0
    %v499 = vadd.f32 0.0, %v498
    %v500 = vpop.f32.mrb[0].mxu0
    %v501 = vadd.f32 0.0, %v500
    %v502 = vpop.f32.mrb[0].mxu0
    %v503 = vadd.f32 0.0, %v502
    %504 = vdwg.mxu0
    %v505 = vmul.f32 %v454, %v497
    %v506 = vmul.f32 %v456, %v499
    %v507 = vmul.f32 %v458, %v501
    %v508 = vmul.f32 %v460, %v503
    %v509 = vadd.f32 %v505, %v507
    %v510 = vrot.slane %v509, 4
    %v511 = vadd.f32 %v509, %v510
    %v512 = vrot.slane %v511, 2
    %v513 = vadd.f32 %v511, %v512
    %v514 = vrot.slane %v513, 1
    %v515 = vadd.f32 %v513, %v514
    %v516 = vadd.f32 %v506, %v508
    %v517 = vrot.slane %v516, 4
    %v518 = vadd.f32 %v516, %v517
    %v519 = vrot.slane %v518, 2
    %v520 = vadd.f32 %v518, %v519
    %v521 = vrot.slane %v520, 1
    %v522 = vadd.f32 %v520, %v521
    %v525 = vcombine.low %v515, %v522
    %v527 = vunpack.c.l.s4 1966171168
    %v528 = vunpack.c.0.s8 %v527
    %v529 = vlaneseq
    %v530 = vshrl.u32 %v529, 7
    %v531 = vsub.s32 %v528, %v530
    %v532 = vrot.slane %v525, %v531
    %v534 = vunpack.c.l.s4 1966171168
    %v535 = vunpack.c.0.s8 %v534
    %v536 = vlaneseq
    %v537 = vshrl.u32 %v536, 7
    %v538 = vsub.s32 %v535, %v537
    %v539 = vrot.slane %v532, %v538
    %v541 = vlaneseq
    %vm542 = vcmp.ge.s32.totalorder %v541, 0
    %vm543 = vcmp.lt.s32.totalorder %v541, 256
    %vm544 = vmand %vm542, %vm543
    %545 = vst.msk [vmem:[#allocation2] sm:$0x3] %vm544, %v539
    // Predicated region
    $region18: #{fused_forward.1} parent=1 // pred_check
      _
    $region19: #{fused_forward.1} parent=1 // pred_check_branch
      %547 = sbr.rel (0) target = $region21
    $region20: #{fused_forward.1} parent=1 // pred_region
      %s549 = ssub.s32 32, 32
      %550 = vsyncadd [#allocation3], %s549
      %s552 = sshll.u32 [#allocation2], 4
      %s553 = int_to_ptr.vmem [resolvable:$true] %s552
      %555 = dma.vmem_to_hbm [thread:$0]  %s553, 32, %s4, [#allocation3]
    $region21: #{fused_forward.1} parent=1 // pred_fallthru
      _
    // Predicated region
    $region22: #{fused_forward.1} parent=1 // pred_check
      _
    $region23: #{fused_forward.1} parent=1 // pred_check_branch
      %557 = sbr.rel (0) target = $region25
    $region24: #{fused_forward.1} parent=1 // pred_region
      %558 = dma.done [#allocation3], 32
    $region25: #{fused_forward.1} parent=1 // pred_fallthru
      _
    %559 = vsyncpa [#allocation3], 1

</llo_original>
